<compile_context>
chip_gen: v6e
topology: v6e:2x2x1
jax: 0.10.0
libtpu: 0.0.40
codegen_flags: <defaults>
</compile_context>

<pallas_src>
import math
from functools import partial

import jax
import jax.numpy as jnp
from jax.experimental import pallas as pl
from jax.experimental.pallas import tpu as pltpu


def _round_up(x, m):
    return (x + m - 1) // m * m


# ----------------------------------------------------------------------------
# pe table (mirrors the torch __init__ / register_buffer)
# ----------------------------------------------------------------------------
def make_positional_encoding(d_model, max_len=5000, dtype=jnp.float32):
    """Build the (max_len, 1, d_model) sinusoidal table (torch buffer `pe`)."""
    assert d_model % 2 == 0, "d_model must be even (sin/cos interleave)"
    position = jnp.arange(max_len, dtype=jnp.float32)[:, None]            # (L, 1)
    div_term = jnp.exp(
        jnp.arange(0, d_model, 2, dtype=jnp.float32)
        * (-math.log(10000.0) / d_model)
    )                                                                      # (D/2,)
    pe = jnp.zeros((max_len, 1, d_model), jnp.float32)
    pe = pe.at[:, 0, 0::2].set(jnp.sin(position * div_term))
    pe = pe.at[:, 0, 1::2].set(jnp.cos(position * div_term))
    return pe.astype(dtype)


# ----------------------------------------------------------------------------
# kernels
# ----------------------------------------------------------------------------
def _pe_add_kernel_3d(x_ref, pe_ref, o_ref):
    # x_ref: (block_s, B, D); pe_ref: (block_s, 1, D) broadcasts over batch.
    x = x_ref[...].astype(jnp.float32)
    pe = pe_ref[...].astype(jnp.float32)
    o_ref[...] = (x + pe).astype(o_ref.dtype)


def _pe_add_kernel_folded(x_ref, pe_ref, o_ref, *, reps):
    # x_ref: (block_s, B*D); pe_ref: (block_s, D) tiled across lanes in-kernel.
    x = x_ref[...].astype(jnp.float32)
    pe = pe_ref[...].astype(jnp.float32)
    if reps > 1:
        pe = jnp.tile(pe, (1, reps))
    o_ref[...] = (x + pe).astype(o_ref.dtype)


# ----------------------------------------------------------------------------
# wrapper
# ----------------------------------------------------------------------------
_MIN_GRID_STEPS = 8          # enough grid steps for dual-TC sharding + overlap


def _vmem_budget_and_limit():
    """Generation-aware VMEM targets (v7x has only 64 MiB per TensorCore)."""
    try:
        cap = pltpu.get_tpu_info().vmem_capacity_bytes
    except Exception:
        cap = 64 * 1024 * 1024
    if cap <= 64 * 1024 * 1024:                      # v7x-class
        return 12 * 1024 * 1024, 32 * 1024 * 1024
    return 24 * 1024 * 1024, 40 * 1024 * 1024        # v5e / v6e (128 MiB)


def positional_encoding(x, pe, *, block_s=None, donate_x=False):
    """Pallas forward: x (S, B, D) + pe[:S] (S, 1, D) -> (S, B, D)."""
    S, B, D = x.shape
    assert pe.shape[0] >= S and pe.shape[1] == 1 and pe.shape[2] == D

    if pe.dtype != x.dtype:
        pe = pe.astype(x.dtype)                      # pe read is only 1/B of x's

    itemsize = jnp.dtype(x.dtype).itemsize
    sub_min = max(8, 32 // itemsize)                 # 8 f32 / 16 bf16 / 32 int8
    budget, limit = _vmem_budget_and_limit()

    # Fold batch into the lane axis when (B, D) would otherwise waste sublanes
    # (B < sub_min) or force masked partial stores (D % 128 != 0).
    use_fold = ((D % 128 != 0) or (B < sub_min)) and B <= 32

    if use_fold:
        lane_x = _round_up(B * D, 128)
        lane_pe = _round_up(D, 128)
        bytes_per_s = (
            2 * 2 * lane_x * itemsize                # x + out, double-buffered
            + 2 * lane_pe * itemsize                 # pe, double-buffered
            + 2 * lane_x * 4                         # in-kernel f32 temps
        )
    else:
        sub_b = _round_up(B, sub_min)
        lane_d = _round_up(D, 128)
        bytes_per_s = (
            2 * 2 * sub_b * lane_d * itemsize
            + 2 * sub_min * lane_d * itemsize
            + 2 * sub_b * lane_d * 4
        )

    if block_s is None:
        block_s = max(1, budget // bytes_per_s)
        # Cap so the grid has at least ~_MIN_GRID_STEPS steps.
        block_s = min(block_s, pl.cdiv(S, _MIN_GRID_STEPS))
    # Sublane alignment; folded layout requires a multiple of 8 for legality.
    if block_s >= sub_min:
        block_s = (block_s // sub_min) * sub_min
    elif use_fold:
        block_s = max(8, (block_s // 8) * 8)
    block_s = max(1, min(block_s, _round_up(S, 8)))

    grid = (pl.cdiv(S, block_s),)
    compiler_params = pltpu.CompilerParams(
        dimension_semantics=("parallel",),
        vmem_limit_bytes=limit,
    )
    io_alias = {0: 0} if donate_x else {}

    if use_fold:
        x2d = x.reshape(S, B * D)                    # contiguous -> free reshape
        pe2d = pe.reshape(pe.shape[0], D)            # full table, no [:S] slice
        out2d = pl.pallas_call(
            partial(_pe_add_kernel_folded, reps=B),
            out_shape=jax.ShapeDtypeStruct((S, B * D), x.dtype),
            grid_spec=pl.GridSpec(
                grid=grid,
                in_specs=[
                    pl.BlockSpec((block_s, B * D), lambda i: (i, 0)),
                    pl.BlockSpec((block_s, D), lambda i: (i, 0)),
                ],
                out_specs=pl.BlockSpec((block_s, B * D), lambda i: (i, 0)),
            ),
            compiler_params=compiler_params,
            input_output_aliases=io_alias,
        )(x2d, pe2d)
        return out2d.reshape(S, B, D)

    return pl.pallas_call(
        _pe_add_kernel_3d,
        out_shape=jax.ShapeDtypeStruct((S, B, D), x.dtype),
        grid_spec=pl.GridSpec(
            grid=grid,
            in_specs=[
                pl.BlockSpec((block_s, B, D), lambda i: (i, 0, 0)),
                pl.BlockSpec((block_s, 1, D), lambda i: (i, 0, 0)),   # full pe table
            ],
            out_specs=pl.BlockSpec((block_s, B, D), lambda i: (i, 0, 0)),
        ),
        compiler_params=compiler_params,
        input_output_aliases=io_alias,
    )(x, pe)


def positional_encoding_ref(x, pe):
    """Pure-JAX reference matching the PyTorch forward."""
    return x + pe[: x.shape[0]].astype(x.dtype)


if __name__ == "__main__":
    key = jax.random.PRNGKey(0)
    pe_add = jax.jit(positional_encoding)

    max_len = 64
    cases = [
        (8, 2, 128),    # small batch          -> folded lane-dense path
        (16, 8, 128),   # dense (B, D) slab    -> 3-D path
        (8, 2, 32),     # d_model < 128        -> folded path, masked lanes
    ]
    for i, (seq_len, batch, d_model) in enumerate(cases):
        k = jax.random.fold_in(key, i)
        x = jax.random.normal(k, (seq_len, batch, d_model), dtype=jnp.float32)
        pe = make_positional_encoding(d_model, max_len=max_len)

        out = jax.block_until_ready(pe_add(x, pe))
        ref = positional_encoding_ref(x, pe)

        assert out.shape == (seq_len, batch, d_model)
        assert jnp.allclose(out, ref, atol=1e-5, rtol=1e-5), (
            f"mismatch vs reference for shape {(seq_len, batch, d_model)}"
        )

    print("KERNEL_OK")
</pallas_src>

<mosaic_0001>
module attributes {stable_mosaic.version = 11 : i64} {
  func.func @_pe_add_kernel_folded(%arg0: i32, %arg1: memref<8x256xf32, #tpu.memory_space<vmem>>, %arg2: memref<8x128xf32, #tpu.memory_space<vmem>>, %arg3: memref<8x256xf32, #tpu.memory_space<vmem>>) attributes {dimension_semantics = [#tpu.dimension_semantics<parallel>], iteration_bounds = array<i64: 1>, scalar_prefetch = 0 : i64, scratch_operands = 0 : i64, tpu.core_type = #tpu.core_type<tc>, window_params = [{transform_indices = @transform_0, window_bounds = array<i64: 8, 256>}, {transform_indices = @transform_1, window_bounds = array<i64: 8, 128>}, {transform_indices = @transform_2, window_bounds = array<i64: 8, 256>}]} {
    %c0 = arith.constant 0 : index
    %c0_0 = arith.constant 0 : index
    %0 = vector.load %arg1[%c0, %c0_0] : memref<8x256xf32, #tpu.memory_space<vmem>>, vector<8x256xf32>
    %c0_1 = arith.constant 0 : index
    %c0_2 = arith.constant 0 : index
    %1 = vector.load %arg2[%c0_1, %c0_2] : memref<8x128xf32, #tpu.memory_space<vmem>>, vector<8x128xf32>
    %2 = tpu.concatenate %1, %1 in 1 : vector<8x128xf32>, vector<8x128xf32> -> vector<8x256xf32>
    %3 = arith.addf %0, %2 : vector<8x256xf32>
    %c0_3 = arith.constant 0 : index
    %c0_4 = arith.constant 0 : index
    %4 = vector.load %arg3[%c0_3, %c0_4] : memref<8x256xf32, #tpu.memory_space<vmem>>, vector<8x256xf32>
    tpu.vector_store %arg3[%c0_3, %c0_4], %3 {strides = array<i32>} : memref<8x256xf32, #tpu.memory_space<vmem>>, vector<8x256xf32>,
    return
  }
  func.func @transform_0(%arg0: i32) -> (i32, i32) {
    %c0_i32 = arith.constant 0 : i32
    %c0_i32_0 = arith.constant 0 : i32
    return %arg0, %c0_i32 : i32, i32
  }
  func.func @transform_1(%arg0: i32) -> (i32, i32) {
    %c0_i32 = arith.constant 0 : i32
    %c0_i32_0 = arith.constant 0 : i32
    return %arg0, %c0_i32 : i32, i32
  }
  func.func @transform_2(%arg0: i32) -> (i32, i32) {
    %c0_i32 = arith.constant 0 : i32
    %c0_i32_0 = arith.constant 0 : i32
    return %arg0, %c0_i32 : i32, i32
  }
}

</mosaic_0001>

<llo_original>
// kernel: positional_encoding.1
$region0: #{positional_encoding.1}
  #allocation0 [shape = 'u32[]', space=smem, size = 0x4, offset = 0x4, fixed_abs, tag = 'smem constant byte address 0x4 - core index']
  #allocation1 [shape = 'u32[144,128]{1,0:T(1,128)}', space=vmem, size = 0x12000, scoped, tag = 'internal scratch']
  %s0 = inlined_call_operand.vmem [shape: f32[8,256], index: 0, kind: input, shape index: {}]
  %s1 = inlined_call_operand.hbm [shape: f32[64,128], index: 1, kind: input, shape index: {}]
  %s2 = inlined_call_operand.vmem [shape: f32[8,256], index: 2, kind: output, shape index: {}]
  %s3 = sld [smem:[#allocation0]]
  $region22: #{positional_encoding.1} parent=0
    _
  %s5 = ssub.s32 1, %s3
  %s6 = scalar_select 0, %s5, %s3
  $region1: #{positional_encoding.1} parent=0
    #allocation2 [shape = 'u8[4096]{0}', space=vmem, size = 0x1000, scoped, tag = 'input window, operand 1, single buffered']
    #allocation3 [shape = 's32[1]{0}', space=sflag, size = 0x4, scoped, tag = 'scoped memory for positional_encoding.1']
    %7 = vsyncpa [#allocation3], 0
    // Predicated region
    $region2: #{positional_encoding.1} parent=1 // pred_check
      _
    $region3: #{positional_encoding.1} parent=1 // pred_check_branch
      %9 = sbr.rel (0) target = $region5
    $region4: #{positional_encoding.1} parent=1 // pred_region
      _
    $region5: #{positional_encoding.1} parent=1 // pred_fallthru
      _
    // Predicated region
    $region6: #{positional_encoding.1} parent=1 // pred_check
      _
    $region7: #{positional_encoding.1} parent=1 // pred_check_branch
      %11 = sbr.rel (0) target = $region9
    $region8: #{positional_encoding.1} parent=1 // pred_region
      %s13 = ssub.s32 128, 128
      %14 = vsyncadd [#allocation3], %s13
      %s16 = sshll.u32 [#allocation2], 4
      %s17 = int_to_ptr.vmem [resolvable:$true] %s16
      %19 = dma.hbm_to_vmem [thread:$0]  %s1, 128, %s17, [#allocation3]
    $region9: #{positional_encoding.1} parent=1 // pred_fallthru
      _
    // Predicated region
    $region10: #{positional_encoding.1} parent=1 // pred_check
      _
    $region11: #{positional_encoding.1} parent=1 // pred_check_branch
      %21 = sbr.rel (0) target = $region13
    $region12: #{positional_encoding.1} parent=1 // pred_region
      %22 = dma.done [#allocation3], 128
    $region13: #{positional_encoding.1} parent=1 // pred_fallthru
      _
    %v23 = vld [vmem:[%s0] sm:$0xff]
    %v24 = vld [vmem:[%s0 + $0x8] sm:$0xff]
    %v25 = vld [vmem:[#allocation2] sm:$0xff]
    %v26 = vadd.f32 %v23, %v25
    %v27 = vadd.f32 %v24, %v25
    %28 = vst [vmem:[%s2] sm:$0xff] %v26
    %29 = vst [vmem:[%s2 + $0x8] sm:$0xff] %v27
    // Predicated region
    $region14: #{positional_encoding.1} parent=1 // pred_check
      _
    $region15: #{positional_encoding.1} parent=1 // pred_check_branch
      %31 = sbr.rel (0) target = $region17
    $region16: #{positional_encoding.1} parent=1 // pred_region
      _
    $region17: #{positional_encoding.1} parent=1 // pred_fallthru
      _
    // Predicated region
    $region18: #{positional_encoding.1} parent=1 // pred_check
      _
    $region19: #{positional_encoding.1} parent=1 // pred_check_branch
      %33 = sbr.rel (0) target = $region21
    $region20: #{positional_encoding.1} parent=1 // pred_region
      _
    $region21: #{positional_encoding.1} parent=1 // pred_fallthru
      _
    %34 = vsyncpa [#allocation3], 1

</llo_original>
